<compile_context>
chip_gen: v6e
topology: v6e:2x2x1
jax: 0.10.0
libtpu: 0.0.40
codegen_flags: <defaults>
</compile_context>

<pallas_src>
import jax
import jax.numpy as jnp
from jax.experimental import pallas as pl
from jax.experimental.pallas import tpu as pltpu


def _round_up(n, m):
    return ((n + m - 1) // m) * m


def _mish(x):
    # mish(x) = x * tanh(softplus(x))
    #         = x * t*(t+2) / (t*(t+2) + 2),  t = exp(x)     (single-exp form)
    # Guard: for x > 20, tanh(softplus(x)) == 1 to f32 precision -> mish(x) = x.
    # Clamp the exp argument so the unselected branch never produces inf/NaN.
    t = jnp.exp(jnp.minimum(x, 20.0))
    p = t * (t + 2.0)
    return jnp.where(x > 20.0, x, x * (p / (p + 2.0)))


def _vae_kernel(x_ref,
                w1, b1, w2, b2,          # encoder layers 1-2
                w34, b34,                # fused encoder-out + decoder-in
                w5, b5, w6, b6,          # decoder layers 2-3 (w6/b6 lane-padded)
                out_ref):
    x = x_ref[...]
    if x.dtype != jnp.float32:
        x = x.astype(jnp.float32)

    h = _mish(jnp.dot(x, w1[...], preferred_element_type=jnp.float32) + b1[...])
    h = _mish(jnp.dot(h, w2[...], preferred_element_type=jnp.float32) + b2[...])
    # Fused: mish( (h @ W3 + b3) @ W4 + b4 ) == mish( h @ (W3@W4) + (b3@W4 + b4) )
    h = _mish(jnp.dot(h, w34[...], preferred_element_type=jnp.float32) + b34[...])
    h = _mish(jnp.dot(h, w5[...], preferred_element_type=jnp.float32) + b5[...])

    adx = jnp.dot(h, w6[...], preferred_element_type=jnp.float32) + b6[...]
    out_ref[...] = adx.astype(out_ref.dtype)


def reliable_vae_forward(x, params, *, batch_tile=512, weight_dtype=None):
    """Full ReliableVAE forward pass in one Pallas kernel.

    x: [B, in_dim] float32
    params: list of 6 (W, b), W pre-transposed to [in, out], b shaped [1, out],
            in forward order (3 encoder layers, 3 decoder layers).
    batch_tile: rows per grid step (multiple of 8); clamped/padded for small B.
    weight_dtype: optional dtype (e.g. jnp.bfloat16 on v6e/v7x) for the matmul
                  operands; accumulation stays f32.
    """
    B, in_dim = x.shape

    # ---- host-side algebraic fusion of the activation-free layer pair ----
    (w1, b1), (w2, b2), (w3, b3), (w4, b4), (w5, b5), (w6, b6) = params
    w34 = w3 @ w4                 # [20, latent] @ [latent, 20] -> [20, 20]
    b34 = b3 @ w4 + b4            # [1, 20]

    # ---- lane-pad the final layer so the output block is 128-lane dense ----
    out_dim = w6.shape[1]
    pad_out = max(_round_up(out_dim, 128), 128)
    w6p = jnp.pad(w6, ((0, 0), (0, pad_out - out_dim)))
    b6p = jnp.pad(b6, ((0, 0), (0, pad_out - out_dim)))

    fused = [(w1, b1), (w2, b2), (w34, b34), (w5, b5), (w6p, b6p)]
    if weight_dtype is not None:
        fused = [(w.astype(weight_dtype), b.astype(jnp.float32)) for (w, b) in fused]

    # ---- batch tiling: large tiles, padded to a whole number of tiles ----
    bt = _round_up(int(min(batch_tile, _round_up(B, 8))), 8)
    B_pad = _round_up(B, bt)
    x_in = x if B_pad == B else jnp.pad(x, ((0, B_pad - B), (0, 0)))
    grid = (B_pad // bt,)

    weight_specs = []
    flat_params = []
    for (w, b) in fused:
        weight_specs.append(pl.BlockSpec(w.shape, lambda i: (0, 0)))
        weight_specs.append(pl.BlockSpec(b.shape, lambda i: (0, 0)))
        flat_params.extend([w, b])

    out = pl.pallas_call(
        _vae_kernel,
        out_shape=jax.ShapeDtypeStruct((B_pad, pad_out), x.dtype),
        grid_spec=pltpu.PrefetchScalarGridSpec(
            num_scalar_prefetch=0,
            grid=grid,
            in_specs=[pl.BlockSpec((bt, in_dim), lambda i: (i, 0))] + weight_specs,
            out_specs=pl.BlockSpec((bt, pad_out), lambda i: (i, 0)),
        ),
        # Batch axis is "parallel" -> shards across v7x's 2 TensorCores.
        # VMEM per tile (f32, bt=512, padded out=128) is < 1 MiB, well under the
        # scoped defaults on v5e/v6e/v7x, so no vmem_limit_bytes override needed.
        compiler_params=pltpu.CompilerParams(
            dimension_semantics=("parallel",)),
    )(x_in, *flat_params)

    return out[:B, :out_dim]


def init_params(key, state_dim, act_dim, latent_dim, hidden=(60, 20)):
    """Parameter init matching the PyTorch module's shapes.

    Returns list of (W [in, out], b [1, out]) in forward order (6 layers).
    """
    in_dim = state_dim * 2 + act_dim
    dims = [in_dim, hidden[0], hidden[1], latent_dim,   # encoder
            hidden[1], hidden[0], in_dim]               # decoder
    params = []
    for idx in range(len(dims) - 1):
        d_in, d_out = dims[idx], dims[idx + 1]
        key, kw, kb = jax.random.split(key, 3)
        bound = 1.0 / jnp.sqrt(d_in)  # PyTorch default Linear init range
        w = jax.random.uniform(kw, (d_in, d_out), jnp.float32, -bound, bound)
        b = jax.random.uniform(kb, (1, d_out), jnp.float32, -bound, bound)
        params.append((w, b))
    return params


def reference_forward(x, params):
    """Plain-JAX reference (unfused, standard mish) for correctness check."""
    def mish(v):
        return v * jnp.tanh(jax.nn.softplus(v))
    h = mish(x @ params[0][0] + params[0][1])
    h = mish(h @ params[1][0] + params[1][1])
    z = h @ params[2][0] + params[2][1]
    h = mish(z @ params[3][0] + params[3][1])
    h = mish(h @ params[4][0] + params[4][1])
    return h @ params[5][0] + params[5][1]


if __name__ == "__main__":
    # Small shapes consistent with the module: state_dim=6, act_dim=4 -> in_dim=16.
    state_dim, act_dim, latent_dim = 6, 4, 8
    hidden = (60, 20)
    batch = 16
    in_dim = state_dim * 2 + act_dim

    key = jax.random.PRNGKey(0)
    kx, kp = jax.random.split(key)
    x = jax.random.normal(kx, (batch, in_dim), jnp.float32)
    params = init_params(kp, state_dim, act_dim, latent_dim, hidden)

    out = reliable_vae_forward(x, params)
    out = jax.block_until_ready(out)

    ref = reference_forward(x, params)
    assert out.shape == (batch, in_dim)
    assert jnp.allclose(out, ref, atol=1e-4, rtol=1e-4), "mismatch vs reference"

    print("KERNEL_OK")
</pallas_src>

<mosaic_0001>
module attributes {stable_mosaic.version = 11 : i64} {
  func.func @_vae_kernel(%arg0: i32, %arg1: memref<16x16xf32, #tpu.memory_space<vmem>>, %arg2: memref<16x60xf32, #tpu.memory_space<vmem>>, %arg3: memref<1x60xf32, #tpu.memory_space<vmem>>, %arg4: memref<60x20xf32, #tpu.memory_space<vmem>>, %arg5: memref<1x20xf32, #tpu.memory_space<vmem>>, %arg6: memref<20x20xf32, #tpu.memory_space<vmem>>, %arg7: memref<1x20xf32, #tpu.memory_space<vmem>>, %arg8: memref<20x60xf32, #tpu.memory_space<vmem>>, %arg9: memref<1x60xf32, #tpu.memory_space<vmem>>, %arg10: memref<60x128xf32, #tpu.memory_space<vmem>>, %arg11: memref<1x128xf32, #tpu.memory_space<vmem>>, %arg12: memref<16x128xf32, #tpu.memory_space<vmem>>) attributes {dimension_semantics = [#tpu.dimension_semantics<parallel>], iteration_bounds = array<i64: 1>, scalar_prefetch = 0 : i64, scratch_operands = 0 : i64, tpu.core_type = #tpu.core_type<tc>, window_params = [{transform_indices = @transform_0, window_bounds = array<i64: 16, 16>}, {pipeline_mode = #tpu.pipeline_mode<synchronous>, transform_indices = @transform_1, window_bounds = array<i64: 16, 60>}, {pipeline_mode = #tpu.pipeline_mode<synchronous>, transform_indices = @transform_2, window_bounds = array<i64: 1, 60>}, {pipeline_mode = #tpu.pipeline_mode<synchronous>, transform_indices = @transform_3, window_bounds = array<i64: 60, 20>}, {pipeline_mode = #tpu.pipeline_mode<synchronous>, transform_indices = @transform_4, window_bounds = array<i64: 1, 20>}, {pipeline_mode = #tpu.pipeline_mode<synchronous>, transform_indices = @transform_5, window_bounds = array<i64: 20, 20>}, {pipeline_mode = #tpu.pipeline_mode<synchronous>, transform_indices = @transform_6, window_bounds = array<i64: 1, 20>}, {pipeline_mode = #tpu.pipeline_mode<synchronous>, transform_indices = @transform_7, window_bounds = array<i64: 20, 60>}, {pipeline_mode = #tpu.pipeline_mode<synchronous>, transform_indices = @transform_8, window_bounds = array<i64: 1, 60>}, {pipeline_mode = #tpu.pipeline_mode<synchronous>, transform_indices = @transform_9, window_bounds = array<i64: 60, 128>}, {pipeline_mode = #tpu.pipeline_mode<synchronous>, transform_indices = @transform_10, window_bounds = array<i64: 1, 128>}, {transform_indices = @transform_11, window_bounds = array<i64: 16, 128>}]} {
    %c0 = arith.constant 0 : index
    %c0_0 = arith.constant 0 : index
    %0 = vector.load %arg1[%c0, %c0_0] : memref<16x16xf32, #tpu.memory_space<vmem>>, vector<16x16xf32>
    %c0_1 = arith.constant 0 : index
    %c0_2 = arith.constant 0 : index
    %1 = vector.load %arg2[%c0_1, %c0_2] : memref<16x60xf32, #tpu.memory_space<vmem>>, vector<16x60xf32>
    %cst = arith.constant dense<0.000000e+00> : vector<16x60xf32>
    %2 = tpu.matmul %0, %1, %cst {dimension_numbers = #tpu.dot_dimension_numbers<[1], [0], [0], [1], [0, 0, 1, 1], [], []>} : vector<16x16xf32>, vector<16x60xf32>, vector<16x60xf32> -> vector<16x60xf32>
    %c0_3 = arith.constant 0 : index
    %c0_4 = arith.constant 0 : index
    %3 = vector.load %arg3[%c0_3, %c0_4] : memref<1x60xf32, #tpu.memory_space<vmem>>, vector<1x60xf32>
    %4 = vector.broadcast %3 : vector<1x60xf32> to vector<16x60xf32>
    %5 = arith.addf %2, %4 : vector<16x60xf32>
    %cst_5 = arith.constant 2.000000e+01 : f32
    %6 = vector.broadcast %cst_5 : f32 to vector<16x60xf32>
    %7 = arith.minimumf %5, %6 : vector<16x60xf32>
    %8 = math.exp %7 : vector<16x60xf32>
    %cst_6 = arith.constant 2.000000e+00 : f32
    %9 = vector.broadcast %cst_6 : f32 to vector<16x60xf32>
    %10 = arith.addf %8, %9 : vector<16x60xf32>
    %11 = arith.mulf %8, %10 : vector<16x60xf32>
    %cst_7 = arith.constant 2.000000e+01 : f32
    %12 = vector.broadcast %cst_7 : f32 to vector<16x60xf32>
    %13 = arith.cmpf ogt, %5, %12 : vector<16x60xf32>
    %cst_8 = arith.constant 2.000000e+00 : f32
    %14 = vector.broadcast %cst_8 : f32 to vector<16x60xf32>
    %15 = arith.addf %11, %14 : vector<16x60xf32>
    %16 = arith.divf %11, %15 : vector<16x60xf32>
    %17 = arith.mulf %5, %16 : vector<16x60xf32>
    %18 = arith.select %13, %5, %17 : vector<16x60xi1>, vector<16x60xf32>
    %c0_9 = arith.constant 0 : index
    %c0_10 = arith.constant 0 : index
    %19 = vector.load %arg4[%c0_9, %c0_10] : memref<60x20xf32, #tpu.memory_space<vmem>>, vector<60x20xf32>
    %cst_11 = arith.constant dense<0.000000e+00> : vector<16x20xf32>
    %20 = tpu.matmul %18, %19, %cst_11 {dimension_numbers = #tpu.dot_dimension_numbers<[1], [0], [0], [1], [0, 0, 1, 1], [], []>} : vector<16x60xf32>, vector<60x20xf32>, vector<16x20xf32> -> vector<16x20xf32>
    %c0_12 = arith.constant 0 : index
    %c0_13 = arith.constant 0 : index
    %21 = vector.load %arg5[%c0_12, %c0_13] : memref<1x20xf32, #tpu.memory_space<vmem>>, vector<1x20xf32>
    %22 = vector.broadcast %21 : vector<1x20xf32> to vector<16x20xf32>
    %23 = arith.addf %20, %22 : vector<16x20xf32>
    %cst_14 = arith.constant 2.000000e+01 : f32
    %24 = vector.broadcast %cst_14 : f32 to vector<16x20xf32>
    %25 = arith.minimumf %23, %24 : vector<16x20xf32>
    %26 = math.exp %25 : vector<16x20xf32>
    %cst_15 = arith.constant 2.000000e+00 : f32
    %27 = vector.broadcast %cst_15 : f32 to vector<16x20xf32>
    %28 = arith.addf %26, %27 : vector<16x20xf32>
    %29 = arith.mulf %26, %28 : vector<16x20xf32>
    %cst_16 = arith.constant 2.000000e+01 : f32
    %30 = vector.broadcast %cst_16 : f32 to vector<16x20xf32>
    %31 = arith.cmpf ogt, %23, %30 : vector<16x20xf32>
    %cst_17 = arith.constant 2.000000e+00 : f32
    %32 = vector.broadcast %cst_17 : f32 to vector<16x20xf32>
    %33 = arith.addf %29, %32 : vector<16x20xf32>
    %34 = arith.divf %29, %33 : vector<16x20xf32>
    %35 = arith.mulf %23, %34 : vector<16x20xf32>
    %36 = arith.select %31, %23, %35 : vector<16x20xi1>, vector<16x20xf32>
    %c0_18 = arith.constant 0 : index
    %c0_19 = arith.constant 0 : index
    %37 = vector.load %arg6[%c0_18, %c0_19] : memref<20x20xf32, #tpu.memory_space<vmem>>, vector<20x20xf32>
    %cst_20 = arith.constant dense<0.000000e+00> : vector<16x20xf32>
    %38 = tpu.matmul %36, %37, %cst_20 {dimension_numbers = #tpu.dot_dimension_numbers<[1], [0], [0], [1], [0, 0, 1, 1], [], []>} : vector<16x20xf32>, vector<20x20xf32>, vector<16x20xf32> -> vector<16x20xf32>
    %c0_21 = arith.constant 0 : index
    %c0_22 = arith.constant 0 : index
    %39 = vector.load %arg7[%c0_21, %c0_22] : memref<1x20xf32, #tpu.memory_space<vmem>>, vector<1x20xf32>
    %40 = vector.broadcast %39 : vector<1x20xf32> to vector<16x20xf32>
    %41 = arith.addf %38, %40 : vector<16x20xf32>
    %cst_23 = arith.constant 2.000000e+01 : f32
    %42 = vector.broadcast %cst_23 : f32 to vector<16x20xf32>
    %43 = arith.minimumf %41, %42 : vector<16x20xf32>
    %44 = math.exp %43 : vector<16x20xf32>
    %cst_24 = arith.constant 2.000000e+00 : f32
    %45 = vector.broadcast %cst_24 : f32 to vector<16x20xf32>
    %46 = arith.addf %44, %45 : vector<16x20xf32>
    %47 = arith.mulf %44, %46 : vector<16x20xf32>
    %cst_25 = arith.constant 2.000000e+01 : f32
    %48 = vector.broadcast %cst_25 : f32 to vector<16x20xf32>
    %49 = arith.cmpf ogt, %41, %48 : vector<16x20xf32>
    %cst_26 = arith.constant 2.000000e+00 : f32
    %50 = vector.broadcast %cst_26 : f32 to vector<16x20xf32>
    %51 = arith.addf %47, %50 : vector<16x20xf32>
    %52 = arith.divf %47, %51 : vector<16x20xf32>
    %53 = arith.mulf %41, %52 : vector<16x20xf32>
    %54 = arith.select %49, %41, %53 : vector<16x20xi1>, vector<16x20xf32>
    %c0_27 = arith.constant 0 : index
    %c0_28 = arith.constant 0 : index
    %55 = vector.load %arg8[%c0_27, %c0_28] : memref<20x60xf32, #tpu.memory_space<vmem>>, vector<20x60xf32>
    %cst_29 = arith.constant dense<0.000000e+00> : vector<16x60xf32>
    %56 = tpu.matmul %54, %55, %cst_29 {dimension_numbers = #tpu.dot_dimension_numbers<[1], [0], [0], [1], [0, 0, 1, 1], [], []>} : vector<16x20xf32>, vector<20x60xf32>, vector<16x60xf32> -> vector<16x60xf32>
    %c0_30 = arith.constant 0 : index
    %c0_31 = arith.constant 0 : index
    %57 = vector.load %arg9[%c0_30, %c0_31] : memref<1x60xf32, #tpu.memory_space<vmem>>, vector<1x60xf32>
    %58 = vector.broadcast %57 : vector<1x60xf32> to vector<16x60xf32>
    %59 = arith.addf %56, %58 : vector<16x60xf32>
    %cst_32 = arith.constant 2.000000e+01 : f32
    %60 = vector.broadcast %cst_32 : f32 to vector<16x60xf32>
    %61 = arith.minimumf %59, %60 : vector<16x60xf32>
    %62 = math.exp %61 : vector<16x60xf32>
    %cst_33 = arith.constant 2.000000e+00 : f32
    %63 = vector.broadcast %cst_33 : f32 to vector<16x60xf32>
    %64 = arith.addf %62, %63 : vector<16x60xf32>
    %65 = arith.mulf %62, %64 : vector<16x60xf32>
    %cst_34 = arith.constant 2.000000e+01 : f32
    %66 = vector.broadcast %cst_34 : f32 to vector<16x60xf32>
    %67 = arith.cmpf ogt, %59, %66 : vector<16x60xf32>
    %cst_35 = arith.constant 2.000000e+00 : f32
    %68 = vector.broadcast %cst_35 : f32 to vector<16x60xf32>
    %69 = arith.addf %65, %68 : vector<16x60xf32>
    %70 = arith.divf %65, %69 : vector<16x60xf32>
    %71 = arith.mulf %59, %70 : vector<16x60xf32>
    %72 = arith.select %67, %59, %71 : vector<16x60xi1>, vector<16x60xf32>
    %c0_36 = arith.constant 0 : index
    %c0_37 = arith.constant 0 : index
    %73 = vector.load %arg10[%c0_36, %c0_37] : memref<60x128xf32, #tpu.memory_space<vmem>>, vector<60x128xf32>
    %cst_38 = arith.constant dense<0.000000e+00> : vector<16x128xf32>
    %74 = tpu.matmul %72, %73, %cst_38 {dimension_numbers = #tpu.dot_dimension_numbers<[1], [0], [0], [1], [0, 0, 1, 1], [], []>} : vector<16x60xf32>, vector<60x128xf32>, vector<16x128xf32> -> vector<16x128xf32>
    %c0_39 = arith.constant 0 : index
    %c0_40 = arith.constant 0 : index
    %75 = vector.load %arg11[%c0_39, %c0_40] : memref<1x128xf32, #tpu.memory_space<vmem>>, vector<1x128xf32>
    %76 = vector.broadcast %75 : vector<1x128xf32> to vector<16x128xf32>
    %77 = arith.addf %74, %76 : vector<16x128xf32>
    %c0_41 = arith.constant 0 : index
    %c0_42 = arith.constant 0 : index
    %78 = vector.load %arg12[%c0_41, %c0_42] : memref<16x128xf32, #tpu.memory_space<vmem>>, vector<16x128xf32>
    tpu.vector_store %arg12[%c0_41, %c0_42], %77 {strides = array<i32>} : memref<16x128xf32, #tpu.memory_space<vmem>>, vector<16x128xf32>,
    return
  }
  func.func @transform_0(%arg0: i32) -> (i32, i32) {
    %c0_i32 = arith.constant 0 : i32
    %c0_i32_0 = arith.constant 0 : i32
    return %arg0, %c0_i32 : i32, i32
  }
  func.func @transform_1(%arg0: i32) -> (i32, i32) {
    %c0_i32 = arith.constant 0 : i32
    %c0_i32_0 = arith.constant 0 : i32
    %c0_i32_1 = arith.constant 0 : i32
    return %c0_i32, %c0_i32_0 : i32, i32
  }
  func.func @transform_2(%arg0: i32) -> (i32, i32) {
    %c0_i32 = arith.constant 0 : i32
    %c0_i32_0 = arith.constant 0 : i32
    %c0_i32_1 = arith.constant 0 : i32
    return %c0_i32, %c0_i32_0 : i32, i32
  }
  func.func @transform_3(%arg0: i32) -> (i32, i32) {
    %c0_i32 = arith.constant 0 : i32
    %c0_i32_0 = arith.constant 0 : i32
    %c0_i32_1 = arith.constant 0 : i32
    return %c0_i32, %c0_i32_0 : i32, i32
  }
  func.func @transform_4(%arg0: i32) -> (i32, i32) {
    %c0_i32 = arith.constant 0 : i32
    %c0_i32_0 = arith.constant 0 : i32
    %c0_i32_1 = arith.constant 0 : i32
    return %c0_i32, %c0_i32_0 : i32, i32
  }
  func.func @transform_5(%arg0: i32) -> (i32, i32) {
    %c0_i32 = arith.constant 0 : i32
    %c0_i32_0 = arith.constant 0 : i32
    %c0_i32_1 = arith.constant 0 : i32
    return %c0_i32, %c0_i32_0 : i32, i32
  }
  func.func @transform_6(%arg0: i32) -> (i32, i32) {
    %c0_i32 = arith.constant 0 : i32
    %c0_i32_0 = arith.constant 0 : i32
    %c0_i32_1 = arith.constant 0 : i32
    return %c0_i32, %c0_i32_0 : i32, i32
  }
  func.func @transform_7(%arg0: i32) -> (i32, i32) {
    %c0_i32 = arith.constant 0 : i32
    %c0_i32_0 = arith.constant 0 : i32
    %c0_i32_1 = arith.constant 0 : i32
    return %c0_i32, %c0_i32_0 : i32, i32
  }
  func.func @transform_8(%arg0: i32) -> (i32, i32) {
    %c0_i32 = arith.constant 0 : i32
    %c0_i32_0 = arith.constant 0 : i32
    %c0_i32_1 = arith.constant 0 : i32
    return %c0_i32, %c0_i32_0 : i32, i32
  }
  func.func @transform_9(%arg0: i32) -> (i32, i32) {
    %c0_i32 = arith.constant 0 : i32
    %c0_i32_0 = arith.constant 0 : i32
    %c0_i32_1 = arith.constant 0 : i32
    return %c0_i32, %c0_i32_0 : i32, i32
  }
  func.func @transform_10(%arg0: i32) -> (i32, i32) {
    %c0_i32 = arith.constant 0 : i32
    %c0_i32_0 = arith.constant 0 : i32
    %c0_i32_1 = arith.constant 0 : i32
    return %c0_i32, %c0_i32_0 : i32, i32
  }
  func.func @transform_11(%arg0: i32) -> (i32, i32) {
    %c0_i32 = arith.constant 0 : i32
    %c0_i32_0 = arith.constant 0 : i32
    return %arg0, %c0_i32 : i32, i32
  }
}

</mosaic_0001>

<llo_original>
// kernel: tpu_custom_call.1
$region0: #{tpu_custom_call.1}
  #allocation0 [shape = 'u32[]', space=smem, size = 0x4, offset = 0x4, fixed_abs, tag = 'smem constant byte address 0x4 - core index']
  #allocation1 [shape = 'u32[144,128]{1,0:T(1,128)}', space=vmem, size = 0x12000, scoped, tag = 'internal scratch']
  %s0 = inlined_call_operand.vmem [shape: f32[16,16], index: 0, kind: input, shape index: {}]
  %s1 = inlined_call_operand.hbm [shape: f32[16,60], index: 1, kind: input, shape index: {}]
  %s2 = inlined_call_operand.hbm [shape: f32[1,60], index: 2, kind: input, shape index: {}]
  %s3 = inlined_call_operand.vmem [shape: f32[60,20], index: 3, kind: input, shape index: {}]
  %s4 = inlined_call_operand.hbm [shape: f32[1,20], index: 4, kind: input, shape index: {}]
  %s5 = inlined_call_operand.vmem [shape: f32[20,20], index: 5, kind: input, shape index: {}]
  %s6 = inlined_call_operand.hbm [shape: f32[1,20], index: 6, kind: input, shape index: {}]
  %s7 = inlined_call_operand.hbm [shape: f32[20,60], index: 7, kind: input, shape index: {}]
  %s8 = inlined_call_operand.hbm [shape: f32[1,60], index: 8, kind: input, shape index: {}]
  %s9 = inlined_call_operand.vmem [shape: f32[60,128], index: 9, kind: input, shape index: {}]
  %s10 = inlined_call_operand.vmem [shape: f32[1,128], index: 10, kind: input, shape index: {}]
  %s11 = inlined_call_operand.hbm [shape: f32[16,128], index: 11, kind: output, shape index: {}]
  %s12 = sld [smem:[#allocation0]]
  $region78: #{tpu_custom_call.1} parent=0
    _
  %s14 = ssub.s32 1, %s12
  %s15 = scalar_select 0, %s14, %s12
  $region1: #{tpu_custom_call.1} parent=0
    #allocation2 [shape = 'u8[8192]{0}', space=vmem, size = 0x2000, scoped, tag = 'input window, operand 1, single buffered']
    #allocation3 [shape = 's32[1]{0}', space=sflag, size = 0x4, scoped, tag = 'scoped memory for tpu_custom_call.1']
    #allocation4 [shape = 's32[1]{0}', space=sflag, size = 0x4, scoped, tag = 'scoped memory for tpu_custom_call.1']
    #allocation5 [shape = 'u8[512]{0}', space=vmem, size = 0x400, scoped, tag = 'input window, operand 2, single buffered']
    #allocation6 [shape = 's32[1]{0}', space=sflag, size = 0x4, scoped, tag = 'scoped memory for tpu_custom_call.1']
    #allocation7 [shape = 'u8[512]{0}', space=vmem, size = 0x400, scoped, tag = 'input window, operand 4, single buffered']
    #allocation8 [shape = 'u8[512]{0}', space=vmem, size = 0x400, scoped, tag = 'input window, operand 6, single buffered']
    #allocation9 [shape = 's32[1]{0}', space=sflag, size = 0x4, scoped, tag = 'scoped memory for tpu_custom_call.1']
    #allocation10 [shape = 'u8[12288]{0}', space=vmem, size = 0x3000, scoped, tag = 'input window, operand 7, single buffered']
    #allocation11 [shape = 'u8[512]{0}', space=vmem, size = 0x400, scoped, tag = 'input window, operand 8, single buffered']
    #allocation12 [shape = 's32[1]{0}', space=sflag, size = 0x4, scoped, tag = 'scoped memory for tpu_custom_call.1']
    #allocation13 [shape = 'u8[8192]{0}', space=vmem, size = 0x2000, scoped, tag = 'output window, operand 0, single buffered']
    %16 = vsyncpa [#allocation3], 0
    %17 = vsyncpa [#allocation6], 0
    %18 = vsyncpa [#allocation9], 0
    %19 = vsyncpa [#allocation12], 0
    %20 = vsyncpa [#allocation4], 0
    // Predicated region
    $region2: #{tpu_custom_call.1} parent=1 // pred_check
      _
    $region3: #{tpu_custom_call.1} parent=1 // pred_check_branch
      %22 = sbr.rel (0) target = $region5
    $region4: #{tpu_custom_call.1} parent=1 // pred_region
      _
    $region5: #{tpu_custom_call.1} parent=1 // pred_fallthru
      _
    // Predicated region
    $region6: #{tpu_custom_call.1} parent=1 // pred_check
      _
    $region7: #{tpu_custom_call.1} parent=1 // pred_check_branch
      %24 = sbr.rel (0) target = $region9
    $region8: #{tpu_custom_call.1} parent=1 // pred_region
      %s26 = ssub.s32 256, 256
      %27 = vsyncadd [#allocation3], %s26
      %s28 = sshll.u32 [#allocation2], 4
      %s29 = int_to_ptr.vmem [resolvable:$true] %s28
      %34 = dma.hbm_to_vmem [thread:$0]  %s1, 256, %s29, [#allocation3], 128, 128, 8
    $region9: #{tpu_custom_call.1} parent=1 // pred_fallthru
      _
    // Predicated region
    $region10: #{tpu_custom_call.1} parent=1 // pred_check
      _
    $region11: #{tpu_custom_call.1} parent=1 // pred_check_branch
      %36 = sbr.rel (0) target = $region13
    $region12: #{tpu_custom_call.1} parent=1 // pred_region
      %s38 = ssub.s32 16, 16
      %39 = vsyncadd [#allocation6], %s38
      %s41 = sshll.u32 [#allocation5], 4
      %s42 = int_to_ptr.vmem [resolvable:$true] %s41
      %44 = dma.hbm_to_vmem [thread:$0]  %s2, 16, %s42, [#allocation6]
    $region13: #{tpu_custom_call.1} parent=1 // pred_fallthru
      _
    // Predicated region
    $region14: #{tpu_custom_call.1} parent=1 // pred_check
      _
    $region15: #{tpu_custom_call.1} parent=1 // pred_check_branch
      %46 = sbr.rel (0) target = $region17
    $region16: #{tpu_custom_call.1} parent=1 // pred_region
      _
    $region17: #{tpu_custom_call.1} parent=1 // pred_fallthru
      _
    // Predicated region
    $region18: #{tpu_custom_call.1} parent=1 // pred_check
      _
    $region19: #{tpu_custom_call.1} parent=1 // pred_check_branch
      %48 = sbr.rel (0) target = $region21
    $region20: #{tpu_custom_call.1} parent=1 // pred_region
      %s50 = ssub.s32 16, 16
      %51 = vsyncadd [#allocation6], %s50
      %s53 = sshll.u32 [#allocation7], 4
      %s54 = int_to_ptr.vmem [resolvable:$true] %s53
      %56 = dma.hbm_to_vmem [thread:$0]  %s4, 16, %s54, [#allocation6]
    $region21: #{tpu_custom_call.1} parent=1 // pred_fallthru
      _
    // Predicated region
    $region22: #{tpu_custom_call.1} parent=1 // pred_check
      _
    $region23: #{tpu_custom_call.1} parent=1 // pred_check_branch
      %58 = sbr.rel (0) target = $region25
    $region24: #{tpu_custom_call.1} parent=1 // pred_region
      _
    $region25: #{tpu_custom_call.1} parent=1 // pred_fallthru
      _
    // Predicated region
    $region26: #{tpu_custom_call.1} parent=1 // pred_check
      _
    $region27: #{tpu_custom_call.1} parent=1 // pred_check_branch
      %60 = sbr.rel (0) target = $region29
    $region28: #{tpu_custom_call.1} parent=1 // pred_region
      %s62 = ssub.s32 16, 16
      %63 = vsyncadd [#allocation9], %s62
      %s65 = sshll.u32 [#allocation8], 4
      %s66 = int_to_ptr.vmem [resolvable:$true] %s65
      %68 = dma.hbm_to_vmem [thread:$0]  %s6, 16, %s66, [#allocation9]
    $region29: #{tpu_custom_call.1} parent=1 // pred_fallthru
      _
    // Predicated region
    $region30: #{tpu_custom_call.1} parent=1 // pred_check
      _
    $region31: #{tpu_custom_call.1} parent=1 // pred_check_branch
      %70 = sbr.rel (0) target = $region33
    $region32: #{tpu_custom_call.1} parent=1 // pred_region
      %s72 = ssub.s32 384, 384
      %73 = vsyncadd [#allocation9], %s72
      %s74 = sshll.u32 [#allocation10], 4
      %s75 = int_to_ptr.vmem [resolvable:$true] %s74
      %80 = dma.hbm_to_vmem [thread:$0]  %s7, 384, %s75, [#allocation9], 128, 128, 8
    $region33: #{tpu_custom_call.1} parent=1 // pred_fallthru
      _
    // Predicated region
    $region34: #{tpu_custom_call.1} parent=1 // pred_check
      _
    $region35: #{tpu_custom_call.1} parent=1 // pred_check_branch
      %82 = sbr.rel (0) target = $region37
    $region36: #{tpu_custom_call.1} parent=1 // pred_region
      %s84 = ssub.s32 16, 16
      %85 = vsyncadd [#allocation12], %s84
      %s87 = sshll.u32 [#allocation11], 4
      %s88 = int_to_ptr.vmem [resolvable:$true] %s87
      %90 = dma.hbm_to_vmem [thread:$0]  %s8, 16, %s88, [#allocation12]
    $region37: #{tpu_custom_call.1} parent=1 // pred_fallthru
      _
    // Predicated region
    $region38: #{tpu_custom_call.1} parent=1 // pred_check
      _
    $region39: #{tpu_custom_call.1} parent=1 // pred_check_branch
      %92 = sbr.rel (0) target = $region41
    $region40: #{tpu_custom_call.1} parent=1 // pred_region
      _
    $region41: #{tpu_custom_call.1} parent=1 // pred_fallthru
      _
    // Predicated region
    $region42: #{tpu_custom_call.1} parent=1 // pred_check
      _
    $region43: #{tpu_custom_call.1} parent=1 // pred_check_branch
      %94 = sbr.rel (0) target = $region45
    $region44: #{tpu_custom_call.1} parent=1 // pred_region
      _
    $region45: #{tpu_custom_call.1} parent=1 // pred_fallthru
      _
    // Predicated region
    $region46: #{tpu_custom_call.1} parent=1 // pred_check
      _
    $region47: #{tpu_custom_call.1} parent=1 // pred_check_branch
      %96 = sbr.rel (0) target = $region49
    $region48: #{tpu_custom_call.1} parent=1 // pred_region
      %97 = dma.done [#allocation3], 256
    $region49: #{tpu_custom_call.1} parent=1 // pred_fallthru
      _
    // Predicated region
    $region50: #{tpu_custom_call.1} parent=1 // pred_check
      _
    $region51: #{tpu_custom_call.1} parent=1 // pred_check_branch
      %99 = sbr.rel (0) target = $region53
    $region52: #{tpu_custom_call.1} parent=1 // pred_region
      %100 = dma.done [#allocation6], 16
    $region53: #{tpu_custom_call.1} parent=1 // pred_fallthru
      _
    // Predicated region
    $region54: #{tpu_custom_call.1} parent=1 // pred_check
      _
    $region55: #{tpu_custom_call.1} parent=1 // pred_check_branch
      %102 = sbr.rel (0) target = $region57
    $region56: #{tpu_custom_call.1} parent=1 // pred_region
      %103 = dma.done [#allocation6], 16
    $region57: #{tpu_custom_call.1} parent=1 // pred_fallthru
      _
    // Predicated region
    $region58: #{tpu_custom_call.1} parent=1 // pred_check
      _
    $region59: #{tpu_custom_call.1} parent=1 // pred_check_branch
      %105 = sbr.rel (0) target = $region61
    $region60: #{tpu_custom_call.1} parent=1 // pred_region
      %106 = dma.done [#allocation9], 16
    $region61: #{tpu_custom_call.1} parent=1 // pred_fallthru
      _
    // Predicated region
    $region62: #{tpu_custom_call.1} parent=1 // pred_check
      _
    $region63: #{tpu_custom_call.1} parent=1 // pred_check_branch
      %108 = sbr.rel (0) target = $region65
    $region64: #{tpu_custom_call.1} parent=1 // pred_region
      %109 = dma.done [#allocation9], 384
    $region65: #{tpu_custom_call.1} parent=1 // pred_fallthru
      _
    // Predicated region
    $region66: #{tpu_custom_call.1} parent=1 // pred_check
      _
    $region67: #{tpu_custom_call.1} parent=1 // pred_check_branch
      %111 = sbr.rel (0) target = $region69
    $region68: #{tpu_custom_call.1} parent=1 // pred_region
      %112 = dma.done [#allocation12], 16
    $region69: #{tpu_custom_call.1} parent=1 // pred_fallthru
      _
    %v113 = vld [vmem:[%s0] sm:$0xff]
    %v114 = vld [vmem:[%s0 + $0x8] sm:$0xff]
    %v115 = vld [vmem:[#allocation2] sm:$0xff]
    %v116 = vld [vmem:[#allocation2 + $0x8] sm:$0xff]
    %v117 = vld [vmem:[#allocation5] sm:$0x1]
    %v119 = vlaneseq
    %v120 = vshrl.u32 %v119, 7
    %v121 = vsub.s32 0, %v120
    %v122 = vrot.slane %v117, %v121
    %vm124 = vcmask 130048
    %v126 = vsel %vm124, %v113, 0
    %v129 = vsel %vm124, %v114, 0
    %131 = vmatprep.subr.mxu0 0.0
    %132 = vmatpush1.msra.mxu0 0.0
    %133 = vmatprep.subr.mxu0 0.0
    %134 = vmatpush1.msra.mxu0 0.0
    %135 = vmatprep.subr.mxu0 0.0
    %136 = vmatpush1.msra.mxu0 0.0
    %137 = vmatprep.subr.mxu0 0.0
    %138 = vmatpush1.msra.mxu0 0.0
    %139 = vmatprep.subr.mxu0 0.0
    %140 = vmatpush1.msra.mxu0 0.0
    %141 = vmatprep.subr.mxu0 0.0
    %142 = vmatpush1.msra.mxu0 0.0
    %143 = vmatprep.subr.mxu0 0.0
    %144 = vmatpush1.msra.mxu0 0.0
    %145 = vmatprep.subr.mxu0 0.0
    %146 = vmatpush1.msra.mxu0 0.0
    %147 = vmatprep.subr.mxu0 0.0
    %148 = vmatpush1.msra.mxu0 0.0
    %149 = vmatprep.subr.mxu0 0.0
    %150 = vmatpush1.msra.mxu0 0.0
    %151 = vmatprep.subr.mxu0 0.0
    %152 = vmatpush1.msra.mxu0 0.0
    %153 = vmatprep.subr.mxu0 0.0
    %154 = vmatpush1.msra.mxu0 0.0
    %155 = vmatprep.subr.mxu0 0.0
    %156 = vmatpush1.msra.mxu0 0.0
    %157 = vmatprep.subr.mxu0 0.0
    %158 = vmatpush1.msra.mxu0 0.0
    %159 = vmatprep.subr.mxu0 0.0
    %160 = vmatpush1.msra.mxu0 %v116
    %161 = vmatprep.subr.mxu0 0.0
    %162 = vmatpush1.msra.mxu0 %v115
    %163 = vmatprep.subr.mxu0 0.0
    %164 = vmatpush2.msra.mxu0 0.0
    %165 = vmatprep.subr.mxu0 0.0
    %166 = vmatpush2.msra.mxu0 0.0
    %167 = vmatprep.subr.mxu0 0.0
    %168 = vmatpush2.msra.mxu0 0.0
    %169 = vmatprep.subr.mxu0 0.0
    %170 = vmatpush2.msra.mxu0 0.0
    %171 = vmatprep.subr.mxu0 0.0
    %172 = vmatpush2.msra.mxu0 0.0
    %173 = vmatprep.subr.mxu0 0.0
    %174 = vmatpush2.msra.mxu0 0.0
    %175 = vmatprep.subr.mxu0 0.0
    %176 = vmatpush2.msra.mxu0 0.0
    %177 = vmatprep.subr.mxu0 0.0
    %178 = vmatpush2.msra.mxu0 0.0
    %179 = vmatprep.subr.mxu0 0.0
    %180 = vmatpush2.msra.mxu0 0.0
    %181 = vmatprep.subr.mxu0 0.0
    %182 = vmatpush2.msra.mxu0 0.0
    %183 = vmatprep.subr.mxu0 0.0
    %184 = vmatpush2.msra.mxu0 0.0
    %185 = vmatprep.subr.mxu0 0.0
    %186 = vmatpush2.msra.mxu0 0.0
    %187 = vmatprep.subr.mxu0 0.0
    %188 = vmatpush2.msra.mxu0 0.0
    %189 = vmatprep.subr.mxu0 0.0
    %190 = vmatpush2.msra.mxu0 0.0
    %191 = vmatprep.subr.mxu0 0.0
    %192 = vmatpush2.msra.mxu0 0.0
    %193 = vmatprep.subr.mxu0 0.0
    %194 = vmatpush2.msra.mxu0 0.0
    %195 = vmatprep.mubr.f32.mxu0 0.0
    %196 = vmatmul.mubr.f32.gmra.mxu0 %v126
    %v197 = vpop.f32.mrf.mxu0
    %v198 = vadd.f32 %v122, %v197
    %v199 = vpop.f32.mrf.mxu0
    %200 = vmatprep.mubr.f32.mxu0 0.0
    %201 = vmatmul.mubr.f32.gmra.mxu0 %v129
    %v202 = vpop.f32.mrf.mxu0
    %v203 = vadd.f32 %v122, %v202
    %v204 = vpop.f32.mrf.mxu0
    %205 = vdwg.mxu0
    %v206 = vmin.f32 %v198, 20.0
    %v207 = vmin.f32 %v203, 20.0
    %v208 = vmul.f32 %v206, 1.442695
    %v209 = vpow.pop %v208
    %v210 = vmul.f32 %v207, 1.442695
    %v211 = vpow.pop %v210
    %v212 = vadd.f32 %v209, 2.0
    %v213 = vadd.f32 %v211, 2.0
    %v214 = vmul.f32 %v209, %v212
    %v215 = vmul.f32 %v211, %v213
    %vm216 = vcmp.gt.f32.partialorder %v198, 20.0
    %vm217 = vcmp.gt.f32.partialorder %v203, 20.0
    %v218 = vadd.f32 %v214, 2.0
    %v219 = vadd.f32 %v215, 2.0
    %v220 = vrcp.pop %v218
    %v221 = vmul.f32 %v214, %v220
    %v222 = vrcp.pop %v219
    %v223 = vmul.f32 %v215, %v222
    %v224 = vmul.f32 %v198, %v221
    %v225 = vmul.f32 %v203, %v223
    %v226 = vsel %vm216, %v198, %v224
    %v227 = vsel %vm217, %v203, %v225
    %v228 = vld [vmem:[%s3] sm:$0xff]
    %v229 = vld [vmem:[%s3 + $0x8] sm:$0xff]
    %v230 = vld [vmem:[%s3 + $0x10] sm:$0xff]
    %v231 = vld [vmem:[%s3 + $0x18] sm:$0xff]
    %v232 = vld [vmem:[%s3 + $0x20] sm:$0xff]
    %v233 = vld [vmem:[%s3 + $0x28] sm:$0xff]
    %v234 = vld [vmem:[%s3 + $0x30] sm:$0xff]
    %v235 = vld [vmem:[%s3 + $0x38] sm:$0xf]
    %v236 = vld [vmem:[#allocation7] sm:$0x1]
    %v238 = vlaneseq
    %v239 = vshrl.u32 %v238, 7
    %v240 = vsub.s32 0, %v239
    %v241 = vrot.slane %v236, %v240
    %vm243 = vcmask 490496
    %v245 = vsel %vm243, %v226, 0
    %v248 = vsel %vm243, %v227, 0
    %vm250 = vcmask 1043456
    %v252 = vsel %vm250, %v235, 0
    %254 = vmatprep.subr.mxu0 0.0
    %255 = vmatpush1.msra.mxu0 0.0
    %256 = vmatprep.subr.mxu0 0.0
    %257 = vmatpush1.msra.mxu0 0.0
    %258 = vmatprep.subr.mxu0 0.0
    %259 = vmatpush1.msra.mxu0 0.0
    %260 = vmatprep.subr.mxu0 0.0
    %261 = vmatpush1.msra.mxu0 0.0
    %262 = vmatprep.subr.mxu0 0.0
    %263 = vmatpush1.msra.mxu0 0.0
    %264 = vmatprep.subr.mxu0 0.0
    %265 = vmatpush1.msra.mxu0 0.0
    %266 = vmatprep.subr.mxu0 0.0
    %267 = vmatpush1.msra.mxu0 0.0
    %268 = vmatprep.subr.mxu0 0.0
    %269 = vmatpush1.msra.mxu0 0.0
    %270 = vmatprep.subr.mxu0 0.0
    %271 = vmatpush1.msra.mxu0 %v252
    %272 = vmatprep.subr.mxu0 0.0
    %273 = vmatpush1.msra.mxu0 %v234
    %274 = vmatprep.subr.mxu0 0.0
    %275 = vmatpush1.msra.mxu0 %v233
    %276 = vmatprep.subr.mxu0 0.0
    %277 = vmatpush1.msra.mxu0 %v232
    %278 = vmatprep.subr.mxu0 0.0
    %279 = vmatpush1.msra.mxu0 %v231
    %280 = vmatprep.subr.mxu0 0.0
    %281 = vmatpush1.msra.mxu0 %v230
    %282 = vmatprep.subr.mxu0 0.0
    %283 = vmatpush1.msra.mxu0 %v229
    %284 = vmatprep.subr.mxu0 0.0
    %285 = vmatpush1.msra.mxu0 %v228
    %286 = vmatprep.subr.mxu0 0.0
    %287 = vmatpush2.msra.mxu0 0.0
    %288 = vmatprep.subr.mxu0 0.0
    %289 = vmatpush2.msra.mxu0 0.0
    %290 = vmatprep.subr.mxu0 0.0
    %291 = vmatpush2.msra.mxu0 0.0
    %292 = vmatprep.subr.mxu0 0.0
    %293 = vmatpush2.msra.mxu0 0.0
    %294 = vmatprep.subr.mxu0 0.0
    %295 = vmatpush2.msra.mxu0 0.0
    %296 = vmatprep.subr.mxu0 0.0
    %297 = vmatpush2.msra.mxu0 0.0
    %298 = vmatprep.subr.mxu0 0.0
    %299 = vmatpush2.msra.mxu0 0.0
    %300 = vmatprep.subr.mxu0 0.0
    %301 = vmatpush2.msra.mxu0 0.0
    %302 = vmatprep.subr.mxu0 0.0
    %303 = vmatpush2.msra.mxu0 0.0
    %304 = vmatprep.subr.mxu0 0.0
    %305 = vmatpush2.msra.mxu0 0.0
    %306 = vmatprep.subr.mxu0 0.0
    %307 = vmatpush2.msra.mxu0 0.0
    %308 = vmatprep.subr.mxu0 0.0
    %309 = vmatpush2.msra.mxu0 0.0
    %310 = vmatprep.subr.mxu0 0.0
    %311 = vmatpush2.msra.mxu0 0.0
    %312 = vmatprep.subr.mxu0 0.0
    %313 = vmatpush2.msra.mxu0 0.0
    %314 = vmatprep.subr.mxu0 0.0
    %315 = vmatpush2.msra.mxu0 0.0
    %316 = vmatprep.subr.mxu0 0.0
    %317 = vmatpush2.msra.mxu0 0.0
    %318 = vmatprep.mubr.f32.mxu0 0.0
    %319 = vmatmul.mubr.f32.gmra.mxu0 %v245
    %v320 = vpop.f32.mrf.mxu0
    %v321 = vadd.f32 %v241, %v320
    %v322 = vpop.f32.mrf.mxu0
    %323 = vmatprep.mubr.f32.mxu0 0.0
    %324 = vmatmul.mubr.f32.gmra.mxu0 %v248
    %v325 = vpop.f32.mrf.mxu0
    %v326 = vadd.f32 %v241, %v325
    %v327 = vpop.f32.mrf.mxu0
    %328 = vdwg.mxu0
    %v329 = vmin.f32 %v321, 20.0
    %v330 = vmin.f32 %v326, 20.0
    %v331 = vmul.f32 %v329, 1.442695
    %v332 = vpow.pop %v331
    %v333 = vmul.f32 %v330, 1.442695
    %v334 = vpow.pop %v333
    %v335 = vadd.f32 %v332, 2.0
    %v336 = vadd.f32 %v334, 2.0
    %v337 = vmul.f32 %v332, %v335
    %v338 = vmul.f32 %v334, %v336
    %vm339 = vcmp.gt.f32.partialorder %v321, 20.0
    %vm340 = vcmp.gt.f32.partialorder %v326, 20.0
    %v341 = vadd.f32 %v337, 2.0
    %v342 = vadd.f32 %v338, 2.0
    %v343 = vrcp.pop %v341
    %v344 = vmul.f32 %v337, %v343
    %v345 = vrcp.pop %v342
    %v346 = vmul.f32 %v338, %v345
    %v347 = vmul.f32 %v321, %v344
    %v348 = vmul.f32 %v326, %v346
    %v349 = vsel %vm339, %v321, %v347
    %v350 = vsel %vm340, %v326, %v348
    %v351 = vld [vmem:[%s5] sm:$0xff]
    %v352 = vld [vmem:[%s5 + $0x8] sm:$0xff]
    %v353 = vld [vmem:[%s5 + $0x10] sm:$0xf]
    %v354 = vld [vmem:[#allocation8] sm:$0x1]
    %v356 = vlaneseq
    %v357 = vshrl.u32 %v356, 7
    %v358 = vsub.s32 0, %v357
    %v359 = vrot.slane %v354, %v358
    %vm361 = vcmask 162816
    %v363 = vsel %vm361, %v349, 0
    %v366 = vsel %vm361, %v350, 0
    %v369 = vsel %vm250, %v353, 0
    %371 = vmatprep.subr.mxu0 0.0
    %372 = vmatpush1.msra.mxu0 0.0
    %373 = vmatprep.subr.mxu0 0.0
    %374 = vmatpush1.msra.mxu0 0.0
    %375 = vmatprep.subr.mxu0 0.0
    %376 = vmatpush1.msra.mxu0 0.0
    %377 = vmatprep.subr.mxu0 0.0
    %378 = vmatpush1.msra.mxu0 0.0
    %379 = vmatprep.subr.mxu0 0.0
    %380 = vmatpush1.msra.mxu0 0.0
    %381 = vmatprep.subr.mxu0 0.0
    %382 = vmatpush1.msra.mxu0 0.0
    %383 = vmatprep.subr.mxu0 0.0
    %384 = vmatpush1.msra.mxu0 0.0
    %385 = vmatprep.subr.mxu0 0.0
    %386 = vmatpush1.msra.mxu0 0.0
    %387 = vmatprep.subr.mxu0 0.0
    %388 = vmatpush1.msra.mxu0 0.0
    %389 = vmatprep.subr.mxu0 0.0
    %390 = vmatpush1.msra.mxu0 0.0
    %391 = vmatprep.subr.mxu0 0.0
    %392 = vmatpush1.msra.mxu0 0.0
    %393 = vmatprep.subr.mxu0 0.0
    %394 = vmatpush1.msra.mxu0 0.0
    %395 = vmatprep.subr.mxu0 0.0
    %396 = vmatpush1.msra.mxu0 0.0
    %397 = vmatprep.subr.mxu0 0.0
    %398 = vmatpush1.msra.mxu0 %v369
    %399 = vmatprep.subr.mxu0 0.0
    %400 = vmatpush1.msra.mxu0 %v352
    %401 = vmatprep.subr.mxu0 0.0
    %402 = vmatpush1.msra.mxu0 %v351
    %403 = vmatprep.subr.mxu0 0.0
    %404 = vmatpush2.msra.mxu0 0.0
    %405 = vmatprep.subr.mxu0 0.0
    %406 = vmatpush2.msra.mxu0 0.0
    %407 = vmatprep.subr.mxu0 0.0
    %408 = vmatpush2.msra.mxu0 0.0
    %409 = vmatprep.subr.mxu0 0.0
    %410 = vmatpush2.msra.mxu0 0.0
    %411 = vmatprep.subr.mxu0 0.0
    %412 = vmatpush2.msra.mxu0 0.0
    %413 = vmatprep.subr.mxu0 0.0
    %414 = vmatpush2.msra.mxu0 0.0
    %415 = vmatprep.subr.mxu0 0.0
    %416 = vmatpush2.msra.mxu0 0.0
    %417 = vmatprep.subr.mxu0 0.0
    %418 = vmatpush2.msra.mxu0 0.0
    %419 = vmatprep.subr.mxu0 0.0
    %420 = vmatpush2.msra.mxu0 0.0
    %421 = vmatprep.subr.mxu0 0.0
    %422 = vmatpush2.msra.mxu0 0.0
    %423 = vmatprep.subr.mxu0 0.0
    %424 = vmatpush2.msra.mxu0 0.0
    %425 = vmatprep.subr.mxu0 0.0
    %426 = vmatpush2.msra.mxu0 0.0
    %427 = vmatprep.subr.mxu0 0.0
    %428 = vmatpush2.msra.mxu0 0.0
    %429 = vmatprep.subr.mxu0 0.0
    %430 = vmatpush2.msra.mxu0 0.0
    %431 = vmatprep.subr.mxu0 0.0
    %432 = vmatpush2.msra.mxu0 0.0
    %433 = vmatprep.subr.mxu0 0.0
    %434 = vmatpush2.msra.mxu0 0.0
    %435 = vmatprep.mubr.f32.mxu0 0.0
    %436 = vmatmul.mubr.f32.gmra.mxu0 %v363
    %v437 = vpop.f32.mrf.mxu0
    %v438 = vadd.f32 %v359, %v437
    %v439 = vpop.f32.mrf.mxu0
    %440 = vmatprep.mubr.f32.mxu0 0.0
    %441 = vmatmul.mubr.f32.gmra.mxu0 %v366
    %v442 = vpop.f32.mrf.mxu0
    %v443 = vadd.f32 %v359, %v442
    %v444 = vpop.f32.mrf.mxu0
    %445 = vdwg.mxu0
    %v446 = vmin.f32 %v438, 20.0
    %v447 = vmin.f32 %v443, 20.0
    %v448 = vmul.f32 %v446, 1.442695
    %v449 = vpow.pop %v448
    %v450 = vmul.f32 %v447, 1.442695
    %v451 = vpow.pop %v450
    %v452 = vadd.f32 %v449, 2.0
    %v453 = vadd.f32 %v451, 2.0
    %v454 = vmul.f32 %v449, %v452
    %v455 = vmul.f32 %v451, %v453
    %vm456 = vcmp.gt.f32.partialorder %v438, 20.0
    %vm457 = vcmp.gt.f32.partialorder %v443, 20.0
    %v458 = vadd.f32 %v454, 2.0
    %v459 = vadd.f32 %v455, 2.0
    %v460 = vrcp.pop %v458
    %v461 = vmul.f32 %v454, %v460
    %v462 = vrcp.pop %v459
    %v463 = vmul.f32 %v455, %v462
    %v464 = vmul.f32 %v438, %v461
    %v465 = vmul.f32 %v443, %v463
    %v466 = vsel %vm456, %v438, %v464
    %v467 = vsel %vm457, %v443, %v465
    %v468 = vld [vmem:[#allocation10] sm:$0xff]
    %v469 = vld [vmem:[#allocation10 + $0x8] sm:$0xff]
    %v470 = vld [vmem:[#allocation10 + $0x10] sm:$0xf]
    %v471 = vld [vmem:[#allocation11] sm:$0x1]
    %v473 = vlaneseq
    %v474 = vshrl.u32 %v473, 7
    %v475 = vsub.s32 0, %v474
    %v476 = vrot.slane %v471, %v475
    %v479 = vsel %vm361, %v466, 0
    %v482 = vsel %vm361, %v467, 0
    %v485 = vsel %vm250, %v470, 0
    %487 = vmatprep.subr.mxu0 0.0
    %488 = vmatpush1.msra.mxu0 0.0
    %489 = vmatprep.subr.mxu0 0.0
    %490 = vmatpush1.msra.mxu0 0.0
    %491 = vmatprep.subr.mxu0 0.0
    %492 = vmatpush1.msra.mxu0 0.0
    %493 = vmatprep.subr.mxu0 0.0
    %494 = vmatpush1.msra.mxu0 0.0
    %495 = vmatprep.subr.mxu0 0.0
    %496 = vmatpush1.msra.mxu0 0.0
    %497 = vmatprep.subr.mxu0 0.0
    %498 = vmatpush1.msra.mxu0 0.0
    %499 = vmatprep.subr.mxu0 0.0
    %500 = vmatpush1.msra.mxu0 0.0
    %501 = vmatprep.subr.mxu0 0.0
    %502 = vmatpush1.msra.mxu0 0.0
    %503 = vmatprep.subr.mxu0 0.0
    %504 = vmatpush1.msra.mxu0 0.0
    %505 = vmatprep.subr.mxu0 0.0
    %506 = vmatpush1.msra.mxu0 0.0
    %507 = vmatprep.subr.mxu0 0.0
    %508 = vmatpush1.msra.mxu0 0.0
    %509 = vmatprep.subr.mxu0 0.0
    %510 = vmatpush1.msra.mxu0 0.0
    %511 = vmatprep.subr.mxu0 0.0
    %512 = vmatpush1.msra.mxu0 0.0
    %513 = vmatprep.subr.mxu0 0.0
    %514 = vmatpush1.msra.mxu0 %v485
    %515 = vmatprep.subr.mxu0 0.0
    %516 = vmatpush1.msra.mxu0 %v469
    %517 = vmatprep.subr.mxu0 0.0
    %518 = vmatpush1.msra.mxu0 %v468
    %519 = vmatprep.subr.mxu0 0.0
    %520 = vmatpush2.msra.mxu0 0.0
    %521 = vmatprep.subr.mxu0 0.0
    %522 = vmatpush2.msra.mxu0 0.0
    %523 = vmatprep.subr.mxu0 0.0
    %524 = vmatpush2.msra.mxu0 0.0
    %525 = vmatprep.subr.mxu0 0.0
    %526 = vmatpush2.msra.mxu0 0.0
    %527 = vmatprep.subr.mxu0 0.0
    %528 = vmatpush2.msra.mxu0 0.0
    %529 = vmatprep.subr.mxu0 0.0
    %530 = vmatpush2.msra.mxu0 0.0
    %531 = vmatprep.subr.mxu0 0.0
    %532 = vmatpush2.msra.mxu0 0.0
    %533 = vmatprep.subr.mxu0 0.0
    %534 = vmatpush2.msra.mxu0 0.0
    %535 = vmatprep.subr.mxu0 0.0
    %536 = vmatpush2.msra.mxu0 0.0
    %537 = vmatprep.subr.mxu0 0.0
    %538 = vmatpush2.msra.mxu0 0.0
    %539 = vmatprep.subr.mxu0 0.0
    %540 = vmatpush2.msra.mxu0 0.0
    %541 = vmatprep.subr.mxu0 0.0
    %542 = vmatpush2.msra.mxu0 0.0
    %543 = vmatprep.subr.mxu0 0.0
    %544 = vmatpush2.msra.mxu0 0.0
    %545 = vmatprep.subr.mxu0 0.0
    %546 = vmatpush2.msra.mxu0 0.0
    %547 = vmatprep.subr.mxu0 0.0
    %548 = vmatpush2.msra.mxu0 0.0
    %549 = vmatprep.subr.mxu0 0.0
    %550 = vmatpush2.msra.mxu0 0.0
    %551 = vmatprep.mubr.f32.mxu0 0.0
    %552 = vmatmul.mubr.f32.gmra.mxu0 %v479
    %v553 = vpop.f32.mrf.mxu0
    %v554 = vadd.f32 %v476, %v553
    %v555 = vpop.f32.mrf.mxu0
    %556 = vmatprep.mubr.f32.mxu0 0.0
    %557 = vmatmul.mubr.f32.gmra.mxu0 %v482
    %v558 = vpop.f32.mrf.mxu0
    %v559 = vadd.f32 %v476, %v558
    %v560 = vpop.f32.mrf.mxu0
    %561 = vdwg.mxu0
    %v562 = vmin.f32 %v554, 20.0
    %v563 = vmin.f32 %v559, 20.0
    %v564 = vmul.f32 %v562, 1.442695
    %v565 = vpow.pop %v564
    %v566 = vmul.f32 %v563, 1.442695
    %v567 = vpow.pop %v566
    %v568 = vadd.f32 %v565, 2.0
    %v569 = vadd.f32 %v567, 2.0
    %v570 = vmul.f32 %v565, %v568
    %v571 = vmul.f32 %v567, %v569
    %vm572 = vcmp.gt.f32.partialorder %v554, 20.0
    %vm573 = vcmp.gt.f32.partialorder %v559, 20.0
    %v574 = vadd.f32 %v570, 2.0
    %v575 = vadd.f32 %v571, 2.0
    %v576 = vrcp.pop %v574
    %v577 = vmul.f32 %v570, %v576
    %v578 = vrcp.pop %v575
    %v579 = vmul.f32 %v571, %v578
    %v580 = vmul.f32 %v554, %v577
    %v581 = vmul.f32 %v559, %v579
    %v582 = vsel %vm572, %v554, %v580
    %v583 = vsel %vm573, %v559, %v581
    %v584 = vld [vmem:[%s9] sm:$0xff]
    %v585 = vld [vmem:[%s9 + $0x8] sm:$0xff]
    %v586 = vld [vmem:[%s9 + $0x10] sm:$0xff]
    %v587 = vld [vmem:[%s9 + $0x18] sm:$0xff]
    %v588 = vld [vmem:[%s9 + $0x20] sm:$0xff]
    %v589 = vld [vmem:[%s9 + $0x28] sm:$0xff]
    %v590 = vld [vmem:[%s9 + $0x30] sm:$0xff]
    %v591 = vld [vmem:[%s9 + $0x38] sm:$0xf]
    %v592 = vld [vmem:[%s10] sm:$0x1]
    %v594 = vlaneseq
    %v595 = vshrl.u32 %v594, 7
    %v596 = vsub.s32 0, %v595
    %v597 = vrot.slane %v592, %v596
    %v600 = vsel %vm243, %v582, 0
    %v603 = vsel %vm243, %v583, 0
    %v606 = vsel %vm250, %v591, 0
    %608 = vmatprep.subr.mxu0 0.0
    %609 = vmatpush1.msra.mxu0 0.0
    %610 = vmatprep.subr.mxu0 0.0
    %611 = vmatpush1.msra.mxu0 0.0
    %612 = vmatprep.subr.mxu0 0.0
    %613 = vmatpush1.msra.mxu0 0.0
    %614 = vmatprep.subr.mxu0 0.0
    %615 = vmatpush1.msra.mxu0 0.0
    %616 = vmatprep.subr.mxu0 0.0
    %617 = vmatpush1.msra.mxu0 0.0
    %618 = vmatprep.subr.mxu0 0.0
    %619 = vmatpush1.msra.mxu0 0.0
    %620 = vmatprep.subr.mxu0 0.0
    %621 = vmatpush1.msra.mxu0 0.0
    %622 = vmatprep.subr.mxu0 0.0
    %623 = vmatpush1.msra.mxu0 0.0
    %624 = vmatprep.subr.mxu0 0.0
    %625 = vmatpush1.msra.mxu0 %v606
    %626 = vmatprep.subr.mxu0 0.0
    %627 = vmatpush1.msra.mxu0 %v590
    %628 = vmatprep.subr.mxu0 0.0
    %629 = vmatpush1.msra.mxu0 %v589
    %630 = vmatprep.subr.mxu0 0.0
    %631 = vmatpush1.msra.mxu0 %v588
    %632 = vmatprep.subr.mxu0 0.0
    %633 = vmatpush1.msra.mxu0 %v587
    %634 = vmatprep.subr.mxu0 0.0
    %635 = vmatpush1.msra.mxu0 %v586
    %636 = vmatprep.subr.mxu0 0.0
    %637 = vmatpush1.msra.mxu0 %v585
    %638 = vmatprep.subr.mxu0 0.0
    %639 = vmatpush1.msra.mxu0 %v584
    %640 = vmatprep.subr.mxu0 0.0
    %641 = vmatpush2.msra.mxu0 0.0
    %642 = vmatprep.subr.mxu0 0.0
    %643 = vmatpush2.msra.mxu0 0.0
    %644 = vmatprep.subr.mxu0 0.0
    %645 = vmatpush2.msra.mxu0 0.0
    %646 = vmatprep.subr.mxu0 0.0
    %647 = vmatpush2.msra.mxu0 0.0
    %648 = vmatprep.subr.mxu0 0.0
    %649 = vmatpush2.msra.mxu0 0.0
    %650 = vmatprep.subr.mxu0 0.0
    %651 = vmatpush2.msra.mxu0 0.0
    %652 = vmatprep.subr.mxu0 0.0
    %653 = vmatpush2.msra.mxu0 0.0
    %654 = vmatprep.subr.mxu0 0.0
    %655 = vmatpush2.msra.mxu0 0.0
    %656 = vmatprep.subr.mxu0 0.0
    %657 = vmatpush2.msra.mxu0 0.0
    %658 = vmatprep.subr.mxu0 0.0
    %659 = vmatpush2.msra.mxu0 0.0
    %660 = vmatprep.subr.mxu0 0.0
    %661 = vmatpush2.msra.mxu0 0.0
    %662 = vmatprep.subr.mxu0 0.0
    %663 = vmatpush2.msra.mxu0 0.0
    %664 = vmatprep.subr.mxu0 0.0
    %665 = vmatpush2.msra.mxu0 0.0
    %666 = vmatprep.subr.mxu0 0.0
    %667 = vmatpush2.msra.mxu0 0.0
    %668 = vmatprep.subr.mxu0 0.0
    %669 = vmatpush2.msra.mxu0 0.0
    %670 = vmatprep.subr.mxu0 0.0
    %671 = vmatpush2.msra.mxu0 0.0
    %672 = vmatprep.mubr.f32.mxu0 0.0
    %673 = vmatmul.mubr.f32.gmra.mxu0 %v600
    %v674 = vpop.f32.mrf.mxu0
    %v675 = vadd.f32 %v597, %v674
    %v676 = vpop.f32.mrf.mxu0
    %677 = vmatprep.mubr.f32.mxu0 0.0
    %678 = vmatmul.mubr.f32.gmra.mxu0 %v603
    %v679 = vpop.f32.mrf.mxu0
    %v680 = vadd.f32 %v597, %v679
    %v681 = vpop.f32.mrf.mxu0
    %682 = vdwg.mxu0
    %683 = vst [vmem:[#allocation13] sm:$0xff] %v675
    %684 = vst [vmem:[#allocation13 + $0x8] sm:$0xff] %v680
    // Predicated region
    $region70: #{tpu_custom_call.1} parent=1 // pred_check
      _
    $region71: #{tpu_custom_call.1} parent=1 // pred_check_branch
      %686 = sbr.rel (0) target = $region73
    $region72: #{tpu_custom_call.1} parent=1 // pred_region
      %s688 = ssub.s32 256, 256
      %689 = vsyncadd [#allocation4], %s688
      %s690 = sshll.u32 [#allocation13], 4
      %s691 = int_to_ptr.vmem [resolvable:$true] %s690
      %696 = dma.vmem_to_hbm [thread:$0]  %s691, 256, %s11, [#allocation4], 128, 128, 8
    $region73: #{tpu_custom_call.1} parent=1 // pred_fallthru
      _
    // Predicated region
    $region74: #{tpu_custom_call.1} parent=1 // pred_check
      _
    $region75: #{tpu_custom_call.1} parent=1 // pred_check_branch
      %698 = sbr.rel (0) target = $region77
    $region76: #{tpu_custom_call.1} parent=1 // pred_region
      %699 = dma.done [#allocation4], 256
    $region77: #{tpu_custom_call.1} parent=1 // pred_fallthru
      _
    %700 = vsyncpa [#allocation3], 1
    %701 = vsyncpa [#allocation6], 1
    %702 = vsyncpa [#allocation9], 1
    %703 = vsyncpa [#allocation12], 1
    %704 = vsyncpa [#allocation4], 1

</llo_original>
